<compile_context>
chip_gen: v7x
topology: tpu7x:2x2x1
jax: 0.10.0
libtpu: 0.0.40
codegen_flags: <defaults>
</compile_context>

<pallas_src>
import jax
import jax.numpy as jnp
from jax.experimental import pallas as pl
from jax.experimental.pallas import tpu as pltpu


def _round_up(x, m):
    return ((x + m - 1) // m) * m


def _lm_kernel(x_ref, wf_ref, w1_ref, b1_ref, w2_ref, b2_ref, logits_ref, h_ref):
    """Grid = (row tiles i, vocab tiles j). h (hidden) is computed once per row
    tile (j == 0) into VMEM scratch and reused for every vocab tile."""
    j = pl.program_id(1)

    @pl.when(j == 0)
    def _():
        x = x_ref[...].astype(jnp.float32)                     # (tm, H+Hf)
        # forget score: VPU multiply + lane reduce (wf has zeros over the
        # token-embedding columns, so this is exactly femb @ w_forget).
        score = jax.nn.sigmoid(
            jnp.sum(x * wf_ref[...], axis=-1, keepdims=True))  # (tm, 1)
        # soft mask: score * embeddings (forget columns are killed by the
        # zero rows padded into W1, so no slicing is required).
        xm = (score * x).astype(jnp.bfloat16)                  # (tm, H+Hf)
        h = jnp.dot(xm, w1_ref[...],
                    preferred_element_type=jnp.float32) + b1_ref[...]
        # TODO(synk): PyTorch nn.GELU defaults to exact erf; tanh approx here.
        h_ref[...] = jax.nn.gelu(h, approximate=True).astype(jnp.bfloat16)

    logits_ref[...] = (
        jnp.dot(h_ref[...], w2_ref[...],
                preferred_element_type=jnp.float32) + b2_ref[...])  # (tm, tn)


def language_model_forward(input_ids, params, *, tm=256, tn=512):
    """Pallas forward pass. input_ids: (B, S) int32. Returns dict like the module.

    tm: row tile (tokens per grid step), clamped down for tiny inputs.
    tn: vocab tile (multiple of 128). Re-derive tm/tn downward on v7x if the
        bf16 (F, tn) W2 block + f32 (tm, tn) logits block approach 64 MiB.
    """
    B, S = input_ids.shape
    emb_tok = params["embed_tokens"]      # (V, H)
    emb_fgt = params["embed_forget"]      # (V, Hf)
    wf = params["w_forget"]               # (Hf, 1)
    w1, b1 = params["w1"], params["b1"]   # (H, F), (1, F)
    w2, b2 = params["w2"], params["b2"]   # (F, V), (1, V)

    V, H = emb_tok.shape
    Hf = emb_fgt.shape[1]
    F_dim = w1.shape[1]

    # --- glue: fused embedding table (one gather, one DMA stream), bf16 ------
    fused_table = jnp.concatenate([emb_tok, emb_fgt], axis=1).astype(jnp.bfloat16)
    M = B * S
    flat_ids = input_ids.reshape(M)
    fused = jnp.take(fused_table, flat_ids, axis=0)            # (M, H+Hf) bf16

    # --- tiling / padding -----------------------------------------------------
    tm_eff = min(tm, _round_up(M, 8))
    M_pad = _round_up(M, tm_eff)
    if M_pad != M:
        fused = jnp.pad(fused, ((0, M_pad - M), (0, 0)))

    tn_eff = min(tn, _round_up(V, 128))
    V_pad = _round_up(V, tn_eff)

    # Weights in bf16 (MXU-native, halves weight DMA); biases stay f32 (added
    # after the f32 accumulation).
    w1_pad = jnp.concatenate(
        [w1, jnp.zeros((Hf, F_dim), w1.dtype)], axis=0).astype(jnp.bfloat16)  # (H+Hf, F)
    b1_f = b1.astype(jnp.float32)                                             # (1, F)
    w2_b = w2.astype(jnp.bfloat16)                                            # (F, V)
    b2_f = b2.astype(jnp.float32)                                             # (1, V)
    if V_pad != V:
        w2_b = jnp.pad(w2_b, ((0, 0), (0, V_pad - V)))
        b2_f = jnp.pad(b2_f, ((0, 0), (0, V_pad - V)))

    # forget projection laid out over the fused feature axis (zeros over the
    # token-embedding columns) so the kernel needs no lane slicing.
    wf_full = jnp.concatenate(
        [jnp.zeros((1, H), jnp.float32), wf.reshape(1, Hf).astype(jnp.float32)],
        axis=1)                                                                # (1, H+Hf)

    grid = (M_pad // tm_eff, V_pad // tn_eff)

    logits_pad = pl.pallas_call(
        _lm_kernel,
        out_shape=jax.ShapeDtypeStruct((M_pad, V_pad), jnp.float32),
        grid_spec=pltpu.PrefetchScalarGridSpec(
            num_scalar_prefetch=0,
            grid=grid,
            in_specs=[
                pl.BlockSpec((tm_eff, H + Hf), lambda i, j: (i, 0)),  # fused emb
                pl.BlockSpec((1, H + Hf), lambda i, j: (0, 0)),       # forget proj
                pl.BlockSpec((H + Hf, F_dim), lambda i, j: (0, 0)),   # W1 (padded)
                pl.BlockSpec((1, F_dim), lambda i, j: (0, 0)),        # b1
                pl.BlockSpec((F_dim, tn_eff), lambda i, j: (0, j)),   # W2 tile
                pl.BlockSpec((1, tn_eff), lambda i, j: (0, j)),       # b2 tile
            ],
            out_specs=pl.BlockSpec((tm_eff, tn_eff), lambda i, j: (i, j)),
            scratch_shapes=[pltpu.VMEM((tm_eff, F_dim), jnp.bfloat16)],  # hidden
        ),
        compiler_params=pltpu.CompilerParams(
            # vocab axis carries the per-row-tile hidden scratch -> "arbitrary";
            # the row axis shards freely across megacore TCs.
            dimension_semantics=("parallel", "arbitrary"),
            vmem_limit_bytes=32 * 1024 * 1024,
        ),
    )(fused, wf_full, w1_pad, b1_f, w2_b, b2_f)

    logits = logits_pad[:M, :V].reshape(B, S, V)

    # keep-score / mask: tiny sigmoid-of-dot, recomputed in the wrapper so the
    # kernel only emits the lane-dense logits stream.
    femb = jnp.take(emb_fgt, flat_ids, axis=0)                 # (M, Hf) f32
    mask = jax.nn.sigmoid(femb @ wf).reshape(B, S)

    return {"logits": logits, "seq_len": S, "loss": None, "mask": mask}


def _reference_forward(input_ids, params):
    """Plain-JAX reference mirroring the kernel's dtype strategy (bf16 operands,
    f32 accumulation) — mathematically the PyTorch soft-mask path."""
    flat_ids = input_ids.reshape(-1)
    lemb = jnp.take(params["embed_tokens"].astype(jnp.bfloat16),
                    flat_ids, axis=0).astype(jnp.float32)
    femb = jnp.take(params["embed_forget"].astype(jnp.bfloat16),
                    flat_ids, axis=0).astype(jnp.float32)
    score = jax.nn.sigmoid(
        jnp.sum(femb * params["w_forget"].reshape(1, -1), axis=-1, keepdims=True))
    x = (score * lemb).astype(jnp.bfloat16)
    h = jnp.dot(x, params["w1"].astype(jnp.bfloat16),
                preferred_element_type=jnp.float32) + params["b1"]
    h = jax.nn.gelu(h, approximate=True).astype(jnp.bfloat16)
    logits = jnp.dot(h, params["w2"].astype(jnp.bfloat16),
                     preferred_element_type=jnp.float32) + params["b2"]
    B, S = input_ids.shape
    return logits.reshape(B, S, -1)


def init_params(key, *, vocab=128, h=32, hf=16, ff=64):
    ks = jax.random.split(key, 7)
    return {
        "embed_tokens": 0.5 * jax.random.normal(ks[0], (vocab, h), jnp.float32),
        "embed_forget": 0.5 * jax.random.normal(ks[1], (vocab, hf), jnp.float32),
        "w_forget": 0.5 * jax.random.normal(ks[2], (hf, 1), jnp.float32),
        "w1": 0.3 * jax.random.normal(ks[3], (h, ff), jnp.float32),
        "b1": 0.1 * jax.random.normal(ks[4], (1, ff), jnp.float32),
        "w2": 0.3 * jax.random.normal(ks[5], (ff, vocab), jnp.float32),
        "b2": 0.1 * jax.random.normal(ks[6], (1, vocab), jnp.float32),
    }


if __name__ == "__main__":
    key = jax.random.PRNGKey(0)
    pkey, ikey = jax.random.split(key)

    B, S, VOCAB = 2, 8, 128
    params = init_params(pkey, vocab=VOCAB, h=32, hf=16, ff=64)
    input_ids = jax.random.randint(ikey, (B, S), 0, VOCAB, dtype=jnp.int32)

    out = language_model_forward(input_ids, params)
    logits = jax.block_until_ready(out["logits"])

    ref = _reference_forward(input_ids, params)
    assert logits.shape == (B, S, VOCAB)
    assert out["seq_len"] == S
    err = float(jnp.max(jnp.abs(logits - ref)))
    assert jnp.allclose(logits, ref, atol=5e-3, rtol=5e-3), f"max abs err {err}"

    print("KERNEL_OK")
</pallas_src>

<mosaic_0001>
module attributes {stable_mosaic.version = 11 : i64} {
  func.func @_lm_kernel(%arg0: i32, %arg1: i32, %arg2: memref<16x48xbf16, #tpu.memory_space<vmem>>, %arg3: memref<1x48xf32, #tpu.memory_space<vmem>>, %arg4: memref<48x64xbf16, #tpu.memory_space<vmem>>, %arg5: memref<1x64xf32, #tpu.memory_space<vmem>>, %arg6: memref<64x128xbf16, #tpu.memory_space<vmem>>, %arg7: memref<1x128xf32, #tpu.memory_space<vmem>>, %arg8: memref<16x128xf32, #tpu.memory_space<vmem>>, %arg9: memref<16x64xbf16, #tpu.memory_space<vmem>>) attributes {dimension_semantics = [#tpu.dimension_semantics<parallel>, #tpu.dimension_semantics<arbitrary>], iteration_bounds = array<i64: 1, 1>, scalar_prefetch = 0 : i64, scratch_operands = 1 : i64, tpu.core_type = #tpu.core_type<tc>, window_params = [{transform_indices = @transform_0, window_bounds = array<i64: 16, 48>}, {pipeline_mode = #tpu.pipeline_mode<synchronous>, transform_indices = @transform_1, window_bounds = array<i64: 1, 48>}, {pipeline_mode = #tpu.pipeline_mode<synchronous>, transform_indices = @transform_2, window_bounds = array<i64: 48, 64>}, {pipeline_mode = #tpu.pipeline_mode<synchronous>, transform_indices = @transform_3, window_bounds = array<i64: 1, 64>}, {transform_indices = @transform_4, window_bounds = array<i64: 64, 128>}, {transform_indices = @transform_5, window_bounds = array<i64: 1, 128>}, {transform_indices = @transform_6, window_bounds = array<i64: 16, 128>}]} {
    %c0_i32 = arith.constant 0 : i32
    %0 = arith.cmpi eq, %arg1, %c0_i32 : i32
    %1 = arith.extui %0 : i1 to i32
    %c0_i32_0 = arith.constant 0 : i32
    %2 = arith.cmpi ne, %1, %c0_i32_0 : i32
    scf.if %2 {
      %c0_8 = arith.constant 0 : index
      %c0_9 = arith.constant 0 : index
      %10 = vector.load %arg2[%c0_8, %c0_9] : memref<16x48xbf16, #tpu.memory_space<vmem>>, vector<16x48xbf16>
      %11 = arith.extf %10 : vector<16x48xbf16> to vector<16x48xf32>
      %c0_10 = arith.constant 0 : index
      %c0_11 = arith.constant 0 : index
      %12 = vector.load %arg3[%c0_10, %c0_11] : memref<1x48xf32, #tpu.memory_space<vmem>>, vector<1x48xf32>
      %13 = vector.broadcast %12 : vector<1x48xf32> to vector<16x48xf32>
      %14 = arith.mulf %11, %13 : vector<16x48xf32>
      %cst_12 = arith.constant dense<0.000000e+00> : vector<16xf32>
      %15 = vector.multi_reduction <add>, %14, %cst_12 [1] : vector<16x48xf32> to vector<16xf32>
      %16 = vector.shape_cast %15 : vector<16xf32> to vector<16x1xf32>
      %17 = arith.negf %16 : vector<16x1xf32>
      %18 = math.exp %17 : vector<16x1xf32>
      %cst_13 = arith.constant 1.000000e+00 : f32
      %19 = vector.broadcast %cst_13 : f32 to vector<16x1xf32>
      %20 = arith.addf %19, %18 : vector<16x1xf32>
      %21 = arith.divf %19, %20 : vector<16x1xf32>
      %22 = vector.broadcast %21 : vector<16x1xf32> to vector<16x48xf32>
      %23 = arith.mulf %22, %11 : vector<16x48xf32>
      %24 = arith.truncf %23 : vector<16x48xf32> to vector<16x48xbf16>
      %c0_14 = arith.constant 0 : index
      %c0_15 = arith.constant 0 : index
      %25 = vector.load %arg4[%c0_14, %c0_15] : memref<48x64xbf16, #tpu.memory_space<vmem>>, vector<48x64xbf16>
      %cst_16 = arith.constant dense<0.000000e+00> : vector<16x64xf32>
      %26 = tpu.matmul %24, %25, %cst_16 {dimension_numbers = #tpu.dot_dimension_numbers<[1], [0], [0], [1], [0, 0, 1, 1], [], []>} : vector<16x48xbf16>, vector<48x64xbf16>, vector<16x64xf32> -> vector<16x64xf32>
      %c0_17 = arith.constant 0 : index
      %c0_18 = arith.constant 0 : index
      %27 = vector.load %arg5[%c0_17, %c0_18] : memref<1x64xf32, #tpu.memory_space<vmem>>, vector<1x64xf32>
      %28 = vector.broadcast %27 : vector<1x64xf32> to vector<16x64xf32>
      %29 = arith.addf %26, %28 : vector<16x64xf32>
      %30 = arith.mulf %29, %29 : vector<16x64xf32>
      %31 = arith.mulf %29, %30 : vector<16x64xf32>
      %cst_19 = arith.constant 4.471500e-02 : f32
      %32 = vector.broadcast %cst_19 : f32 to vector<16x64xf32>
      %33 = arith.mulf %32, %31 : vector<16x64xf32>
      %34 = arith.addf %29, %33 : vector<16x64xf32>
      %cst_20 = arith.constant 0.797884583 : f32
      %35 = vector.broadcast %cst_20 : f32 to vector<16x64xf32>
      %36 = arith.mulf %35, %34 : vector<16x64xf32>
      %37 = math.tanh %36 : vector<16x64xf32>
      %cst_21 = arith.constant 1.000000e+00 : f32
      %38 = vector.broadcast %cst_21 : f32 to vector<16x64xf32>
      %39 = arith.addf %38, %37 : vector<16x64xf32>
      %cst_22 = arith.constant 5.000000e-01 : f32
      %40 = vector.broadcast %cst_22 : f32 to vector<16x64xf32>
      %41 = arith.mulf %40, %39 : vector<16x64xf32>
      %42 = arith.mulf %29, %41 : vector<16x64xf32>
      %43 = arith.truncf %42 : vector<16x64xf32> to vector<16x64xbf16>
      %c0_23 = arith.constant 0 : index
      %c0_24 = arith.constant 0 : index
      %44 = vector.load %arg9[%c0_23, %c0_24] : memref<16x64xbf16, #tpu.memory_space<vmem>>, vector<16x64xbf16>
      tpu.vector_store %arg9[%c0_23, %c0_24], %43 {strides = array<i32>} : memref<16x64xbf16, #tpu.memory_space<vmem>>, vector<16x64xbf16>,
    } else {
    }
    %c0 = arith.constant 0 : index
    %c0_1 = arith.constant 0 : index
    %3 = vector.load %arg9[%c0, %c0_1] : memref<16x64xbf16, #tpu.memory_space<vmem>>, vector<16x64xbf16>
    %c0_2 = arith.constant 0 : index
    %c0_3 = arith.constant 0 : index
    %4 = vector.load %arg6[%c0_2, %c0_3] : memref<64x128xbf16, #tpu.memory_space<vmem>>, vector<64x128xbf16>
    %cst = arith.constant dense<0.000000e+00> : vector<16x128xf32>
    %5 = tpu.matmul %3, %4, %cst {dimension_numbers = #tpu.dot_dimension_numbers<[1], [0], [0], [1], [0, 0, 1, 1], [], []>} : vector<16x64xbf16>, vector<64x128xbf16>, vector<16x128xf32> -> vector<16x128xf32>
    %c0_4 = arith.constant 0 : index
    %c0_5 = arith.constant 0 : index
    %6 = vector.load %arg7[%c0_4, %c0_5] : memref<1x128xf32, #tpu.memory_space<vmem>>, vector<1x128xf32>
    %7 = vector.broadcast %6 : vector<1x128xf32> to vector<16x128xf32>
    %8 = arith.addf %5, %7 : vector<16x128xf32>
    %c0_6 = arith.constant 0 : index
    %c0_7 = arith.constant 0 : index
    %9 = vector.load %arg8[%c0_6, %c0_7] : memref<16x128xf32, #tpu.memory_space<vmem>>, vector<16x128xf32>
    tpu.vector_store %arg8[%c0_6, %c0_7], %8 {strides = array<i32>} : memref<16x128xf32, #tpu.memory_space<vmem>>, vector<16x128xf32>,
    return
  }
  func.func @transform_0(%arg0: i32, %arg1: i32) -> (i32, i32) {
    %c0_i32 = arith.constant 0 : i32
    %c0_i32_0 = arith.constant 0 : i32
    return %arg0, %c0_i32 : i32, i32
  }
  func.func @transform_1(%arg0: i32, %arg1: i32) -> (i32, i32) {
    %c0_i32 = arith.constant 0 : i32
    %c0_i32_0 = arith.constant 0 : i32
    %c0_i32_1 = arith.constant 0 : i32
    return %c0_i32, %c0_i32_0 : i32, i32
  }
  func.func @transform_2(%arg0: i32, %arg1: i32) -> (i32, i32) {
    %c0_i32 = arith.constant 0 : i32
    %c0_i32_0 = arith.constant 0 : i32
    %c0_i32_1 = arith.constant 0 : i32
    return %c0_i32, %c0_i32_0 : i32, i32
  }
  func.func @transform_3(%arg0: i32, %arg1: i32) -> (i32, i32) {
    %c0_i32 = arith.constant 0 : i32
    %c0_i32_0 = arith.constant 0 : i32
    %c0_i32_1 = arith.constant 0 : i32
    return %c0_i32, %c0_i32_0 : i32, i32
  }
  func.func @transform_4(%arg0: i32, %arg1: i32) -> (i32, i32) {
    %c0_i32 = arith.constant 0 : i32
    %c0_i32_0 = arith.constant 0 : i32
    return %c0_i32, %arg1 : i32, i32
  }
  func.func @transform_5(%arg0: i32, %arg1: i32) -> (i32, i32) {
    %c0_i32 = arith.constant 0 : i32
    %c0_i32_0 = arith.constant 0 : i32
    return %c0_i32, %arg1 : i32, i32
  }
  func.func @transform_6(%arg0: i32, %arg1: i32) -> (i32, i32) {
    %c0_i32 = arith.constant 0 : i32
    return %arg0, %arg1 : i32, i32
  }
}

</mosaic_0001>

<llo_original>
// kernel: tpu_custom_call.1
$region0: #{tpu_custom_call.1}
  #allocation0 [shape = 'u32[]', space=smem, size = 0x4, offset = 0x4, fixed_abs, tag = 'smem constant byte address 0x4 - core index']
  #allocation1 [shape = 'u32[144,128]{1,0:T(1,128)}', space=vmem, size = 0x12000, scoped, tag = 'internal scratch']
  #allocation2 [shape = 'bf16[16,64]{1,0:T(16,128)(2,1)}', space=vmem, size = 0x1000, scoped, tag = 'scratch operand']
  %s0 = inlined_call_operand.hbm [shape: bf16[16,48], index: 0, kind: input, shape index: {}]
  %s1 = inlined_call_operand.vmem [shape: f32[1,48], index: 1, kind: input, shape index: {}]
  %s2 = inlined_call_operand.hbm [shape: bf16[48,64], index: 2, kind: input, shape index: {}]
  %s3 = inlined_call_operand.vmem [shape: f32[1,64], index: 3, kind: input, shape index: {}]
  %s4 = inlined_call_operand.hbm [shape: bf16[64,128], index: 4, kind: input, shape index: {}]
  %s5 = inlined_call_operand.vmem [shape: f32[1,128], index: 5, kind: input, shape index: {}]
  %s6 = inlined_call_operand.hbm [shape: f32[16,128], index: 6, kind: output, shape index: {}]
  %s7 = sld [smem:[#allocation0]]
  $region50: #{tpu_custom_call.1} parent=0
    _
  %s9 = ssub.s32 1, %s7
  %s10 = scalar_select 0, %s9, %s7
  $region1: #{tpu_custom_call.1} parent=0
    #allocation3 [shape = 'u8[4096]{0}', space=vmem, size = 0x1000, scoped, tag = 'input window, operand 0, single buffered']
    #allocation4 [shape = 's32[1]{0}', space=sflag, size = 0x4, scoped, tag = 'scoped memory for tpu_custom_call.1']
    #allocation5 [shape = 's32[1]{0}', space=sflag, size = 0x4, scoped, tag = 'scoped memory for tpu_custom_call.1']
    #allocation6 [shape = 'u8[12288]{0}', space=vmem, size = 0x3000, scoped, tag = 'input window, operand 2, single buffered']
    #allocation7 [shape = 's32[1]{0}', space=sflag, size = 0x4, scoped, tag = 'scoped memory for tpu_custom_call.1']
    #allocation8 [shape = 'u8[16384]{0}', space=vmem, size = 0x4000, scoped, tag = 'input window, operand 4, single buffered']
    #allocation9 [shape = 'u8[8192]{0}', space=vmem, size = 0x2000, scoped, tag = 'output window, operand 0, single buffered']
    %11 = vsyncpa [#allocation4], 0
    %12 = vsyncpa [#allocation7], 0
    %13 = vsyncpa [#allocation5], 0
    // Predicated region
    $region2: #{tpu_custom_call.1} parent=1 // pred_check
      _
    $region3: #{tpu_custom_call.1} parent=1 // pred_check_branch
      %15 = sbr.rel (0) target = $region5
    $region4: #{tpu_custom_call.1} parent=1 // pred_region
      %s17 = ssub.s32 128, 128
      %18 = vsyncadd [#allocation4], %s17
      %s19 = sshll.u32 [#allocation3], 4
      %s20 = int_to_ptr.vmem [resolvable:$true] %s19
      %25 = dma.hbm_to_vmem [thread:$0]  %s0, 128, %s20, [#allocation4], 64, 64, 4
    $region5: #{tpu_custom_call.1} parent=1 // pred_fallthru
      _
    // Predicated region
    $region6: #{tpu_custom_call.1} parent=1 // pred_check
      _
    $region7: #{tpu_custom_call.1} parent=1 // pred_check_branch
      %27 = sbr.rel (0) target = $region9
    $region8: #{tpu_custom_call.1} parent=1 // pred_region
      _
    $region9: #{tpu_custom_call.1} parent=1 // pred_fallthru
      _
    // Predicated region
    $region10: #{tpu_custom_call.1} parent=1 // pred_check
      _
    $region11: #{tpu_custom_call.1} parent=1 // pred_check_branch
      %29 = sbr.rel (0) target = $region13
    $region12: #{tpu_custom_call.1} parent=1 // pred_region
      %s31 = ssub.s32 384, 384
      %32 = vsyncadd [#allocation7], %s31
      %s33 = sshll.u32 [#allocation6], 4
      %s34 = int_to_ptr.vmem [resolvable:$true] %s33
      %39 = dma.hbm_to_vmem [thread:$0]  %s2, 384, %s34, [#allocation7], 64, 64, 4
    $region13: #{tpu_custom_call.1} parent=1 // pred_fallthru
      _
    // Predicated region
    $region14: #{tpu_custom_call.1} parent=1 // pred_check
      _
    $region15: #{tpu_custom_call.1} parent=1 // pred_check_branch
      %41 = sbr.rel (0) target = $region17
    $region16: #{tpu_custom_call.1} parent=1 // pred_region
      _
    $region17: #{tpu_custom_call.1} parent=1 // pred_fallthru
      _
    // Predicated region
    $region18: #{tpu_custom_call.1} parent=1 // pred_check
      _
    $region19: #{tpu_custom_call.1} parent=1 // pred_check_branch
      %43 = sbr.rel (0) target = $region21
    $region20: #{tpu_custom_call.1} parent=1 // pred_region
      %s45 = ssub.s32 512, 512
      %46 = vsyncadd [#allocation7], %s45
      %s47 = sshll.u32 [#allocation8], 4
      %s48 = int_to_ptr.vmem [resolvable:$true] %s47
      %53 = dma.hbm_to_vmem [thread:$0]  %s4, 512, %s48, [#allocation7], 64, 64, 4
    $region21: #{tpu_custom_call.1} parent=1 // pred_fallthru
      _
    // Predicated region
    $region22: #{tpu_custom_call.1} parent=1 // pred_check
      _
    $region23: #{tpu_custom_call.1} parent=1 // pred_check_branch
      %55 = sbr.rel (0) target = $region25
    $region24: #{tpu_custom_call.1} parent=1 // pred_region
      _
    $region25: #{tpu_custom_call.1} parent=1 // pred_fallthru
      _
    // Predicated region
    $region26: #{tpu_custom_call.1} parent=1 // pred_check
      _
    $region27: #{tpu_custom_call.1} parent=1 // pred_check_branch
      %57 = sbr.rel (0) target = $region29
    $region28: #{tpu_custom_call.1} parent=1 // pred_region
      %58 = dma.done [#allocation4], 128
    $region29: #{tpu_custom_call.1} parent=1 // pred_fallthru
      _
    // Predicated region
    $region30: #{tpu_custom_call.1} parent=1 // pred_check
      _
    $region31: #{tpu_custom_call.1} parent=1 // pred_check_branch
      %60 = sbr.rel (0) target = $region33
    $region32: #{tpu_custom_call.1} parent=1 // pred_region
      %61 = dma.done [#allocation7], 384
    $region33: #{tpu_custom_call.1} parent=1 // pred_fallthru
      _
    // Predicated region
    $region34: #{tpu_custom_call.1} parent=1 // pred_check
      _
    $region35: #{tpu_custom_call.1} parent=1 // pred_check_branch
      %63 = sbr.rel (0) target = $region37
    $region36: #{tpu_custom_call.1} parent=1 // pred_region
      %64 = dma.done [#allocation7], 512
    $region37: #{tpu_custom_call.1} parent=1 // pred_fallthru
      _
    %p66 = scmp.eq.s32.totalorder 0, 0
    // Predicated region
    $region38: #{tpu_custom_call.1} parent=1 // pred_check
      %p67 = pneg %p66
    $region39: #{tpu_custom_call.1} parent=1 // pred_check_branch
      %69 = sbr.rel (%p67) target = $region41
    $region40: #{tpu_custom_call.1} parent=1 // pred_region
      %v70 = vld [vmem:[#allocation3] sm:$0xf]
      %v71 = vld [vmem:[#allocation3 + $0x4] sm:$0xf]
      %v72 = vunpack.c.l.bf16 %v70
      %v73 = vunpack.c.l.bf16 %v71
      %v74 = vld [vmem:[%s1] sm:$0x1]
      %v76 = vlaneseq
      %v77 = vshrl.u32 %v76, 7
      %v78 = vsub.s32 0, %v77
      %v79 = vrot.slane %v74, %v78
      %v81 = vmul.f32 %v72, %v79
      %v82 = vmul.f32 %v73, %v79
      %vm83 = vcmask 392192
      %v84 = vsel %vm83, %v81, 0.0
      %85 = vadd.xlane.f32.xlu0 %v84
      %v86 = vpop.xlane.xlu0 %85
      %v87 = vsel %vm83, %v82, 0.0
      %88 = vadd.xlane.f32.xlu0 %v87
      %v89 = vpop.xlane.xlu0 %88
      %v90 = vxor.u32 %v86, 2147483648
      %v91 = vxor.u32 %v89, 2147483648
      %v92 = vmul.f32 %v90, 1.442695
      %v93 = vpow.pop %v92
      %v94 = vmul.f32 %v91, 1.442695
      %v95 = vpow.pop %v94
      %v96 = vadd.f32 %v93, 1.0
      %v97 = vadd.f32 %v95, 1.0
      %v98 = vrcp.pop %v96
      %v99 = vmul.f32 1.0, %v98
      %v100 = vrcp.pop %v97
      %v101 = vmul.f32 1.0, %v100
      %v102 = vmul.f32 %v99, %v72
      %v103 = vmul.f32 %v101, %v73
      %v104 = vpack.c.bf16 %v103, %v102
      %v105 = vld [vmem:[#allocation6] sm:$0xf]
      %v106 = vld [vmem:[#allocation6 + $0x4] sm:$0xf]
      %v107 = vld [vmem:[#allocation6 + $0x8] sm:$0xf]
      %v108 = vld [vmem:[#allocation6 + $0xc] sm:$0xf]
      %v109 = vld [vmem:[#allocation6 + $0x10] sm:$0xf]
      %v110 = vld [vmem:[#allocation6 + $0x14] sm:$0xf]
      %v111 = vld [vmem:[%s3] sm:$0x1]
      %v113 = vlaneseq
      %v114 = vshrl.u32 %v113, 7
      %v115 = vsub.s32 0, %v114
      %v116 = vrot.slane %v111, %v115
      %v124 = vunpack.c.l.b16 %v105
      %v125 = vunpack.c.l.b16 %v106
      %v126 = vunpack.c.l.b16 %v107
      %v127 = vunpack.c.l.b16 %v108
      %v128 = vunpack.c.l.b16 %v109
      %v129 = vunpack.c.l.b16 %v110
      %v130 = vpack.c.b16 %v125, %v124
      %v131 = vpack.c.b16 %v127, %v126
      %v132 = vpack.c.b16 %v129, %v128
      %v137 = vsel %vm83, %v104, 0
      %139 = vmatprep.subr.bf16.mxu0 0
      %140 = vmatpush1.bf16.msra.mxu0 %v130
      %141 = vmatprep.subr.bf16.mxu0 0
      %142 = vmatpush1.bf16.msra.mxu0 %v131
      %143 = vmatprep.subr.bf16.mxu0 0
      %144 = vmatpush1.bf16.msra.mxu0 %v132
      %145 = vmatprep.subr.bf16.mxu0 0
      %146 = vmatpush1.bf16.msra.mxu0 0
      %147 = vmatprep.subr.bf16.mxu0 0
      %148 = vmatpush1.bf16.msra.mxu0 0
      %149 = vmatprep.subr.bf16.mxu0 0
      %150 = vmatpush1.bf16.msra.mxu0 0
      %151 = vmatprep.subr.bf16.mxu0 0
      %152 = vmatpush1.bf16.msra.mxu0 0
      %153 = vmatprep.subr.bf16.mxu0 0
      %154 = vmatpush1.bf16.msra.mxu0 0
      %155 = vmatprep.subr.bf16.mxu0 0
      %156 = vmatpush1.bf16.msra.mxu0 0
      %157 = vmatprep.subr.bf16.mxu0 0
      %158 = vmatpush1.bf16.msra.mxu0 0
      %159 = vmatprep.subr.bf16.mxu0 0
      %160 = vmatpush1.bf16.msra.mxu0 0
      %161 = vmatprep.subr.bf16.mxu0 0
      %162 = vmatpush1.bf16.msra.mxu0 0
      %163 = vmatprep.subr.bf16.mxu0 0
      %164 = vmatpush1.bf16.msra.mxu0 0
      %165 = vmatprep.subr.bf16.mxu0 0
      %166 = vmatpush1.bf16.msra.mxu0 0
      %167 = vmatprep.subr.bf16.mxu0 0
      %168 = vmatpush1.bf16.msra.mxu0 0
      %169 = vmatprep.subr.bf16.mxu0 0
      %170 = vmatpush1.bf16.msra.mxu0 0
      %171 = vmatprep.mubr.bf16.mxu0 0
      %172 = vmatmul.mubr.bf16.gmra.mrb[0].mxu0 %v137
      %v173 = vpop.f32.mrb[0].mxu0
      %v174 = vadd.f32 %v116, %v173
      %v175 = vpop.f32.mrb[0].mxu0
      %v176 = vpop.f32.mrb[0].mxu0
      %v177 = vadd.f32 %v116, %v176
      %v178 = vpop.f32.mrb[0].mxu0
      %179 = vdwg.mxu0
      %v180 = vmul.f32 %v174, %v174
      %v181 = vmul.f32 %v177, %v177
      %v182 = vmul.f32 %v174, %v180
      %v183 = vmul.f32 %v177, %v181
      %v184 = vmul.f32 %v182, 0.044715
      %v185 = vmul.f32 %v183, 0.044715
      %v186 = vadd.f32 %v174, %v184
      %v187 = vadd.f32 %v177, %v185
      %v188 = vmul.f32 %v186, 0.7978846
      %v189 = vmul.f32 %v187, 0.7978846
      %v190 = vtanh.pop %v188
      %v191 = vtanh.pop %v189
      %v192 = vadd.f32 %v190, 1.0
      %v193 = vadd.f32 %v191, 1.0
      %v194 = vmul.f32 %v192, 0.5
      %v195 = vmul.f32 %v193, 0.5
      %v196 = vmul.f32 %v174, %v194
      %v197 = vmul.f32 %v177, %v195
      %v198 = vpack.c.bf16 %v197, %v196
      %vm199 = vcmask 523264
      %200 = vst.msk [vmem:[#allocation2] sm:$0xff] %vm199, %v198
    $region41: #{tpu_custom_call.1} parent=1 // pred_fallthru
      _
    %v201 = vld [vmem:[#allocation2] sm:$0xff]
    %v202 = vld [vmem:[#allocation8] sm:$0xf]
    %v203 = vld [vmem:[#allocation8 + $0x4] sm:$0xf]
    %v204 = vld [vmem:[#allocation8 + $0x8] sm:$0xf]
    %v205 = vld [vmem:[#allocation8 + $0xc] sm:$0xf]
    %v206 = vld [vmem:[#allocation8 + $0x10] sm:$0xf]
    %v207 = vld [vmem:[#allocation8 + $0x14] sm:$0xf]
    %v208 = vld [vmem:[#allocation8 + $0x18] sm:$0xf]
    %v209 = vld [vmem:[#allocation8 + $0x1c] sm:$0xf]
    %v210 = vld [vmem:[%s5] sm:$0x1]
    %v212 = vlaneseq
    %v213 = vshrl.u32 %v212, 7
    %v214 = vsub.s32 0, %v213
    %v215 = vrot.slane %v210, %v214
    %v225 = vunpack.c.l.b16 %v202
    %v226 = vunpack.c.l.b16 %v203
    %v227 = vunpack.c.l.b16 %v204
    %v228 = vunpack.c.l.b16 %v205
    %v229 = vunpack.c.l.b16 %v206
    %v230 = vunpack.c.l.b16 %v207
    %v231 = vunpack.c.l.b16 %v208
    %v232 = vunpack.c.l.b16 %v209
    %v233 = vpack.c.b16 %v226, %v225
    %v234 = vpack.c.b16 %v228, %v227
    %v235 = vpack.c.b16 %v230, %v229
    %v236 = vpack.c.b16 %v232, %v231
    %vm241 = vcmask 523264
    %v243 = vsel %vm241, %v201, 0
    %245 = vmatprep.subr.bf16.mxu0 0
    %246 = vmatpush1.bf16.msra.mxu0 %v233
    %247 = vmatprep.subr.bf16.mxu0 0
    %248 = vmatpush1.bf16.msra.mxu0 %v234
    %249 = vmatprep.subr.bf16.mxu0 0
    %250 = vmatpush1.bf16.msra.mxu0 %v235
    %251 = vmatprep.subr.bf16.mxu0 0
    %252 = vmatpush1.bf16.msra.mxu0 %v236
    %253 = vmatprep.subr.bf16.mxu0 0
    %254 = vmatpush1.bf16.msra.mxu0 0
    %255 = vmatprep.subr.bf16.mxu0 0
    %256 = vmatpush1.bf16.msra.mxu0 0
    %257 = vmatprep.subr.bf16.mxu0 0
    %258 = vmatpush1.bf16.msra.mxu0 0
    %259 = vmatprep.subr.bf16.mxu0 0
    %260 = vmatpush1.bf16.msra.mxu0 0
    %261 = vmatprep.subr.bf16.mxu0 0
    %262 = vmatpush1.bf16.msra.mxu0 0
    %263 = vmatprep.subr.bf16.mxu0 0
    %264 = vmatpush1.bf16.msra.mxu0 0
    %265 = vmatprep.subr.bf16.mxu0 0
    %266 = vmatpush1.bf16.msra.mxu0 0
    %267 = vmatprep.subr.bf16.mxu0 0
    %268 = vmatpush1.bf16.msra.mxu0 0
    %269 = vmatprep.subr.bf16.mxu0 0
    %270 = vmatpush1.bf16.msra.mxu0 0
    %271 = vmatprep.subr.bf16.mxu0 0
    %272 = vmatpush1.bf16.msra.mxu0 0
    %273 = vmatprep.subr.bf16.mxu0 0
    %274 = vmatpush1.bf16.msra.mxu0 0
    %275 = vmatprep.subr.bf16.mxu0 0
    %276 = vmatpush1.bf16.msra.mxu0 0
    %277 = vmatprep.mubr.bf16.mxu0 0
    %278 = vmatmul.mubr.bf16.gmra.mrb[0].mxu0 %v243
    %v279 = vpop.f32.mrb[0].mxu0
    %v280 = vadd.f32 %v215, %v279
    %v281 = vpop.f32.mrb[0].mxu0
    %v282 = vpop.f32.mrb[0].mxu0
    %v283 = vadd.f32 %v215, %v282
    %v284 = vpop.f32.mrb[0].mxu0
    %285 = vdwg.mxu0
    %286 = vst [vmem:[#allocation9] sm:$0xff] %v280
    %287 = vst [vmem:[#allocation9 + $0x8] sm:$0xff] %v283
    // Predicated region
    $region42: #{tpu_custom_call.1} parent=1 // pred_check
      _
    $region43: #{tpu_custom_call.1} parent=1 // pred_check_branch
      %289 = sbr.rel (0) target = $region45
    $region44: #{tpu_custom_call.1} parent=1 // pred_region
      %s291 = ssub.s32 256, 256
      %292 = vsyncadd [#allocation5], %s291
      %s293 = sshll.u32 [#allocation9], 4
      %s294 = int_to_ptr.vmem [resolvable:$true] %s293
      %299 = dma.vmem_to_hbm [thread:$0]  %s294, 256, %s6, [#allocation5], 128, 128, 8
    $region45: #{tpu_custom_call.1} parent=1 // pred_fallthru
      _
    // Predicated region
    $region46: #{tpu_custom_call.1} parent=1 // pred_check
      _
    $region47: #{tpu_custom_call.1} parent=1 // pred_check_branch
      %301 = sbr.rel (0) target = $region49
    $region48: #{tpu_custom_call.1} parent=1 // pred_region
      %302 = dma.done [#allocation5], 256
    $region49: #{tpu_custom_call.1} parent=1 // pred_fallthru
      _
    %303 = vsyncpa [#allocation4], 1
    %304 = vsyncpa [#allocation7], 1
    %305 = vsyncpa [#allocation5], 1

</llo_original>
